<compile_context>
chip_gen: v5e
topology: v5e:2x2
jax: 0.10.0
libtpu: 0.0.40
codegen_flags: <defaults>
</compile_context>

<pallas_src>
import functools

import numpy as np
import jax
import jax.numpy as jnp
from jax.experimental import pallas as pl
from jax.experimental.pallas import tpu as pltpu

# ----------------------------- small config ---------------------------------
B = 2                      # batch
IMG_C, IMG_H, IMG_W = 3, 16, 16
PATCH = 4
L = (IMG_H // PATCH) * (IMG_W // PATCH)   # 16 spatial locations
D = 32                     # joint (image/text) embedding dim
CTX_DIM = 32               # text transformer width (clip_model.ln_final.weight.shape[0])
N_CLS = 4                  # number of classes
N_CTX = 4                  # n_ctx_pos == n_ctx_neg
T = 8                      # token seq length = 1 (SOS) + N_CTX + 3 (name, EOS, pad)
N_HEADS = 4
EPS = 1e-5
PATCH_DIM = IMG_C * PATCH * PATCH

assert D == CTX_DIM        # allows packing b_img / ln gamma / ln beta into one (3, D) input


# ------------------------------ fused Pallas kernel ---------------------------
def _dualcoop_fused_kernel(p_ref, wimg_ref, vec_ref, eos_ref, proj_ref, o_ref):
    """Fused forward tail (single grid step):
       patches @ W_img + b  -> image L2-norm over D (lane axis)
       ln_final(eos) @ text_projection -> text L2-norm over D        (done once)
       sim = 20 * img_n @ txt_n^T       (ONE matmul, == 20 * F.conv1d(...))
       w   = softmax(sim_pos, spatial)  (batched over B)
       out = 5 * sum(sim * [w; w], spatial)
    """
    # vec_ref rows: 0 = b_img, 1 = ln_final gamma, 2 = ln_final beta   (all width 32)
    # ---- image features, (B*L, D): D sits on the lane axis (no transpose).
    feats = (jnp.dot(p_ref[...], wimg_ref[...],
                     preferred_element_type=jnp.float32) + vec_ref[0:1, :])
    img_n = feats * jax.lax.rsqrt(jnp.sum(feats * feats, axis=-1, keepdims=True))

    # ---- text head (computed ONCE): ln_final + text_projection + L2-norm.
    x = eos_ref[...]                                   # (2*N_CLS, CTX_DIM)
    mu = jnp.mean(x, axis=-1, keepdims=True)
    var = jnp.mean((x - mu) ** 2, axis=-1, keepdims=True)
    xn = (x - mu) * jax.lax.rsqrt(var + EPS) * vec_ref[1:2, :] + vec_ref[2:3, :]
    txt = jnp.dot(xn, proj_ref[...], preferred_element_type=jnp.float32)   # (2C, D)
    txt_n = txt * jax.lax.rsqrt(jnp.sum(txt * txt, axis=-1, keepdims=True))

    # ---- ONE fused similarity matmul: (B*L, D) x (2C, D)^T -> (B*L, 2C).
    dn = (((1,), (1,)), ((), ()))                      # contract last (D) axis of both
    sim = 20.0 * jax.lax.dot_general(img_n, txt_n, dn,
                                     preferred_element_type=jnp.float32)  # (B*L, 2C)
    sim3 = sim.reshape(B, L, 2 * N_CLS)                # L=16 multiple of 8 -> free reshape
    sp = sim3[:, :, N_CLS:]                            # positive half (B, L, C)

    # ---- batched spatial softmax over L + both weighted sums (no per-batch loop).
    m = jnp.max(sp, axis=1, keepdims=True)
    e = jnp.exp(sp - m)
    w = e / jnp.sum(e, axis=1, keepdims=True)          # exact (parity with F.softmax)
    out_neg = 5.0 * jnp.sum(sim3[:, :, :N_CLS] * w, axis=1)   # (B, C)
    out_pos = 5.0 * jnp.sum(sp * w, axis=1)                    # (B, C)
    o_ref[...] = jnp.concatenate([out_neg, out_pos], axis=-1)  # single (B, 2C) slab store


# ------------------------------ plain-JAX glue --------------------------------
def prompt_learner_forward(params):
    """MLCPromptLearner.forward(cls_id=None)."""
    ctx_pos = jnp.broadcast_to(params["ctx_pos"][None], (N_CLS, N_CTX, CTX_DIM))
    ctx_neg = jnp.broadcast_to(params["ctx_neg"][None], (N_CLS, N_CTX, CTX_DIM))
    prompts_pos = jnp.concatenate(
        [params["token_prefix_pos"], ctx_pos, params["token_suffix_pos"]], axis=1)
    prompts_neg = jnp.concatenate(
        [params["token_prefix_neg"], ctx_neg, params["token_suffix_neg"]], axis=1)
    prompts = jnp.concatenate([prompts_neg, prompts_pos], axis=0)   # (2C, T, CTX_DIM)
    return prompts, params["tokenized_prompts"]


def _layer_norm(x, g, b):
    mu = jnp.mean(x, axis=-1, keepdims=True)
    var = jnp.mean((x - mu) ** 2, axis=-1, keepdims=True)
    return (x - mu) * jax.lax.rsqrt(var + EPS) * g + b


def _transformer_layer(x, p):
    """Single CLIP-style pre-LN residual attention block, causal mask."""
    n, t, dm = x.shape
    hd = dm // N_HEADS
    h = _layer_norm(x, p["ln1_g"], p["ln1_b"])
    qkv = h @ p["w_qkv"] + p["b_qkv"]
    q, k, v = jnp.split(qkv, 3, axis=-1)

    def sh(a):
        return a.reshape(n, t, N_HEADS, hd).transpose(0, 2, 1, 3)

    q, k, v = sh(q), sh(k), sh(v)
    att = jnp.einsum("nhqd,nhkd->nhqk", q, k) / jnp.sqrt(hd).astype(jnp.float32)
    mask = jnp.triu(jnp.full((t, t), -jnp.inf, dtype=jnp.float32), k=1)
    att = jax.nn.softmax(att + mask, axis=-1)
    o = jnp.einsum("nhqk,nhkd->nhqd", att, v).transpose(0, 2, 1, 3).reshape(n, t, dm)
    x = x + o @ p["w_o"] + p["b_o"]
    h = _layer_norm(x, p["ln2_g"], p["ln2_b"])
    h = jax.nn.gelu(h @ p["w_fc1"] + p["b_fc1"], approximate=False)
    x = x + h @ p["w_fc2"] + p["b_fc2"]
    return x


def dualcoop_forward(params, image):
    # ---- image encoder front-end: NCHW -> non-overlapping patches (XLA glue).
    x = image.astype(jnp.float32).reshape(
        B, IMG_C, IMG_H // PATCH, PATCH, IMG_W // PATCH, PATCH)
    patches = x.transpose(0, 2, 4, 1, 3, 5).reshape(B * L, PATCH_DIM)

    # ---- MLCPromptLearner + text transformer body (plain-JAX glue).
    # TODO(synk): multi-layer CLIP text transformer / tokenizer are external
    # clip_model deps; one deterministic pre-LN block + fixed tokens stand in.
    prompts, _ = prompt_learner_forward(params)
    t = prompts + params["pos_emb"][None]                 # (2C, T, CTX_DIM)
    t = _transformer_layer(t, params["tfm"])

    # tokenized_prompts is a compile-time constant -> static EOS slice, no
    # runtime argmax / gather.
    tok_np = params["tokenized_prompts"]                  # numpy, never traced
    eos_idx = np.argmax(tok_np, axis=-1)
    if np.all(eos_idx == eos_idx[0]):
        eos_x = t[:, int(eos_idx[0]), :]                  # (2C, CTX_DIM) static slice
    else:                                                 # (not hit at these shapes)
        eos_x = t[jnp.arange(t.shape[0]), jnp.asarray(eos_idx)]

    # pack b_img / ln_final gamma / ln_final beta into ONE tiny (3, D) input.
    vecs = jnp.stack([params["b_img"].reshape(D),
                      params["ln_final_g"],
                      params["ln_final_b"]], axis=0)      # (3, 32)

    # ---- everything else in ONE fused Pallas kernel (single grid step).
    out = pl.pallas_call(
        _dualcoop_fused_kernel,
        out_shape=jax.ShapeDtypeStruct((B, 2 * N_CLS), jnp.float32),
        grid=(1,),
        in_specs=[
            pl.BlockSpec((B * L, PATCH_DIM), lambda i: (0, 0)),
            pl.BlockSpec((PATCH_DIM, D), lambda i: (0, 0)),
            pl.BlockSpec((3, D), lambda i: (0, 0)),
            pl.BlockSpec((2 * N_CLS, CTX_DIM), lambda i: (0, 0)),
            pl.BlockSpec((CTX_DIM, D), lambda i: (0, 0)),
        ],
        out_specs=pl.BlockSpec((B, 2 * N_CLS), lambda i: (0, 0)),
        compiler_params=pltpu.CompilerParams(dimension_semantics=("arbitrary",)),
    )(
        patches,
        params["w_img"],
        vecs,
        eos_x,
        params["text_projection"],
    )

    # torch: output.resize(b, 2, c // 2)  (contiguous -> same as reshape)
    return out.reshape(B, 2, N_CLS)


# ------------------------------ parameter init -------------------------------
def init_params(key):
    ks = iter(jax.random.split(key, 32))

    def nrm(shape, std=0.02):
        return (std * jax.random.normal(next(ks), shape)).astype(jnp.float32)

    n_suffix = T - 1 - N_CTX
    params = {
        # synthetic image encoder
        "w_img": nrm((PATCH_DIM, D), 0.05),
        "b_img": jnp.zeros((D,), jnp.float32),
        # MLCPromptLearner (generic context, std=0.02 like nn.init.normal_)
        "ctx_pos": nrm((N_CTX, CTX_DIM)),
        "ctx_neg": nrm((N_CTX, CTX_DIM)),
        "token_prefix_pos": nrm((N_CLS, 1, CTX_DIM)),
        "token_suffix_pos": nrm((N_CLS, n_suffix, CTX_DIM)),
        "token_prefix_neg": nrm((N_CLS, 1, CTX_DIM)),
        "token_suffix_neg": nrm((N_CLS, n_suffix, CTX_DIM)),
        # TextEncoder
        "pos_emb": nrm((T, CTX_DIM), 0.01),
        "ln_final_g": jnp.ones((CTX_DIM,), jnp.float32),
        "ln_final_b": jnp.zeros((CTX_DIM,), jnp.float32),
        "text_projection": nrm((CTX_DIM, D), CTX_DIM ** -0.5),
        "tfm": {
            "ln1_g": jnp.ones((CTX_DIM,), jnp.float32),
            "ln1_b": jnp.zeros((CTX_DIM,), jnp.float32),
            "ln2_g": jnp.ones((CTX_DIM,), jnp.float32),
            "ln2_b": jnp.zeros((CTX_DIM,), jnp.float32),
            "w_qkv": nrm((CTX_DIM, 3 * CTX_DIM)),
            "b_qkv": jnp.zeros((3 * CTX_DIM,), jnp.float32),
            "w_o": nrm((CTX_DIM, CTX_DIM)),
            "b_o": jnp.zeros((CTX_DIM,), jnp.float32),
            "w_fc1": nrm((CTX_DIM, 4 * CTX_DIM)),
            "b_fc1": jnp.zeros((4 * CTX_DIM,), jnp.float32),
            "w_fc2": nrm((4 * CTX_DIM, CTX_DIM)),
            "b_fc2": jnp.zeros((CTX_DIM,), jnp.float32),
        },
    }
    # tokenized prompts (neg then pos); EOS token (49407) is the argmax, at index 6.
    # Kept as numpy: it is a compile-time constant used only for the static EOS slice.
    tok = [[49406, 345, 345, 345, 345, 100 + i, 49407, 0] for i in range(2 * N_CLS)]
    params["tokenized_prompts"] = np.array(tok, dtype=np.int32)
    return params


# ----------------------------------- main ------------------------------------
if __name__ == "__main__":
    key = jax.random.PRNGKey(0)
    pkey, ikey = jax.random.split(key)
    params = init_params(pkey)
    image = jax.random.normal(ikey, (B, IMG_C, IMG_H, IMG_W), dtype=jnp.float32)

    logits = jax.jit(functools.partial(dualcoop_forward, params))(image)
    jax.block_until_ready(logits)
    assert logits.shape == (B, 2, N_CLS), logits.shape
    assert jnp.all(jnp.isfinite(logits))
    print("KERNEL_OK")
</pallas_src>

<mosaic_0001>
module attributes {stable_mosaic.version = 11 : i64} {
  func.func @_dualcoop_fused_kernel(%arg0: i32, %arg1: memref<32x48xf32, #tpu.memory_space<vmem>>, %arg2: memref<48x32xf32, #tpu.memory_space<vmem>>, %arg3: memref<3x32xf32, #tpu.memory_space<vmem>>, %arg4: memref<8x32xf32, #tpu.memory_space<vmem>>, %arg5: memref<32x32xf32, #tpu.memory_space<vmem>>, %arg6: memref<2x8xf32, #tpu.memory_space<vmem>>) attributes {dimension_semantics = [#tpu.dimension_semantics<arbitrary>], iteration_bounds = array<i64: 1>, scalar_prefetch = 0 : i64, scratch_operands = 0 : i64, tpu.core_type = #tpu.core_type<tc>, window_params = [{pipeline_mode = #tpu.pipeline_mode<synchronous>, transform_indices = @transform_0, window_bounds = array<i64: 32, 48>}, {pipeline_mode = #tpu.pipeline_mode<synchronous>, transform_indices = @transform_1, window_bounds = array<i64: 48, 32>}, {pipeline_mode = #tpu.pipeline_mode<synchronous>, transform_indices = @transform_2, window_bounds = array<i64: 3, 32>}, {pipeline_mode = #tpu.pipeline_mode<synchronous>, transform_indices = @transform_3, window_bounds = array<i64: 8, 32>}, {pipeline_mode = #tpu.pipeline_mode<synchronous>, transform_indices = @transform_4, window_bounds = array<i64: 32, 32>}, {pipeline_mode = #tpu.pipeline_mode<synchronous>, transform_indices = @transform_5, window_bounds = array<i64: 2, 8>}]} {
    %c0 = arith.constant 0 : index
    %c0_0 = arith.constant 0 : index
    %0 = vector.load %arg1[%c0, %c0_0] : memref<32x48xf32, #tpu.memory_space<vmem>>, vector<32x48xf32>
    %c0_1 = arith.constant 0 : index
    %c0_2 = arith.constant 0 : index
    %1 = vector.load %arg2[%c0_1, %c0_2] : memref<48x32xf32, #tpu.memory_space<vmem>>, vector<48x32xf32>
    %cst = arith.constant dense<0.000000e+00> : vector<32x32xf32>
    %2 = tpu.matmul %0, %1, %cst {dimension_numbers = #tpu.dot_dimension_numbers<[1], [0], [0], [1], [0, 0, 1, 1], [], []>} : vector<32x48xf32>, vector<48x32xf32>, vector<32x32xf32> -> vector<32x32xf32>
    %c0_3 = arith.constant 0 : index
    %c0_4 = arith.constant 0 : index
    %3 = vector.load %arg3[%c0_3, %c0_4] : memref<3x32xf32, #tpu.memory_space<vmem>>, vector<1x32xf32>
    %4 = vector.broadcast %3 : vector<1x32xf32> to vector<32x32xf32>
    %5 = arith.addf %2, %4 : vector<32x32xf32>
    %6 = arith.mulf %5, %5 : vector<32x32xf32>
    %cst_5 = arith.constant dense<0.000000e+00> : vector<32xf32>
    %7 = vector.multi_reduction <add>, %6, %cst_5 [1] : vector<32x32xf32> to vector<32xf32>
    %8 = vector.shape_cast %7 : vector<32xf32> to vector<32x1xf32>
    %9 = math.rsqrt %8 : vector<32x1xf32>
    %10 = vector.broadcast %9 : vector<32x1xf32> to vector<32x32xf32>
    %11 = arith.mulf %5, %10 : vector<32x32xf32>
    %c0_6 = arith.constant 0 : index
    %c0_7 = arith.constant 0 : index
    %12 = vector.load %arg4[%c0_6, %c0_7] : memref<8x32xf32, #tpu.memory_space<vmem>>, vector<8x32xf32>
    %cst_8 = arith.constant dense<0.000000e+00> : vector<8xf32>
    %13 = vector.multi_reduction <add>, %12, %cst_8 [1] : vector<8x32xf32> to vector<8xf32>
    %14 = vector.shape_cast %13 : vector<8xf32> to vector<8x1xf32>
    %cst_9 = arith.constant 3.200000e+01 : f32
    %15 = vector.broadcast %cst_9 : f32 to vector<8x1xf32>
    %16 = arith.divf %14, %15 : vector<8x1xf32>
    %17 = vector.broadcast %16 : vector<8x1xf32> to vector<8x32xf32>
    %18 = arith.subf %12, %17 : vector<8x32xf32>
    %19 = arith.mulf %18, %18 : vector<8x32xf32>
    %cst_10 = arith.constant dense<0.000000e+00> : vector<8xf32>
    %20 = vector.multi_reduction <add>, %19, %cst_10 [1] : vector<8x32xf32> to vector<8xf32>
    %21 = vector.shape_cast %20 : vector<8xf32> to vector<8x1xf32>
    %cst_11 = arith.constant 3.200000e+01 : f32
    %22 = vector.broadcast %cst_11 : f32 to vector<8x1xf32>
    %23 = arith.divf %21, %22 : vector<8x1xf32>
    %24 = vector.broadcast %16 : vector<8x1xf32> to vector<8x32xf32>
    %25 = arith.subf %12, %24 : vector<8x32xf32>
    %cst_12 = arith.constant 9.99999974E-6 : f32
    %26 = vector.broadcast %cst_12 : f32 to vector<8x1xf32>
    %27 = arith.addf %23, %26 : vector<8x1xf32>
    %28 = math.rsqrt %27 : vector<8x1xf32>
    %29 = vector.broadcast %28 : vector<8x1xf32> to vector<8x32xf32>
    %30 = arith.mulf %25, %29 : vector<8x32xf32>
    %c1 = arith.constant 1 : index
    %c0_13 = arith.constant 0 : index
    %31 = vector.load %arg3[%c1, %c0_13] : memref<3x32xf32, #tpu.memory_space<vmem>>, vector<1x32xf32>
    %32 = vector.broadcast %31 : vector<1x32xf32> to vector<8x32xf32>
    %33 = arith.mulf %30, %32 : vector<8x32xf32>
    %c2 = arith.constant 2 : index
    %c0_14 = arith.constant 0 : index
    %34 = vector.load %arg3[%c2, %c0_14] : memref<3x32xf32, #tpu.memory_space<vmem>>, vector<1x32xf32>
    %35 = vector.broadcast %34 : vector<1x32xf32> to vector<8x32xf32>
    %36 = arith.addf %33, %35 : vector<8x32xf32>
    %c0_15 = arith.constant 0 : index
    %c0_16 = arith.constant 0 : index
    %37 = vector.load %arg5[%c0_15, %c0_16] : memref<32x32xf32, #tpu.memory_space<vmem>>, vector<32x32xf32>
    %cst_17 = arith.constant dense<0.000000e+00> : vector<8x32xf32>
    %38 = tpu.matmul %36, %37, %cst_17 {dimension_numbers = #tpu.dot_dimension_numbers<[1], [0], [0], [1], [0, 0, 1, 1], [], []>} : vector<8x32xf32>, vector<32x32xf32>, vector<8x32xf32> -> vector<8x32xf32>
    %39 = arith.mulf %38, %38 : vector<8x32xf32>
    %cst_18 = arith.constant dense<0.000000e+00> : vector<8xf32>
    %40 = vector.multi_reduction <add>, %39, %cst_18 [1] : vector<8x32xf32> to vector<8xf32>
    %41 = vector.shape_cast %40 : vector<8xf32> to vector<8x1xf32>
    %42 = math.rsqrt %41 : vector<8x1xf32>
    %43 = vector.broadcast %42 : vector<8x1xf32> to vector<8x32xf32>
    %44 = arith.mulf %38, %43 : vector<8x32xf32>
    %cst_19 = arith.constant dense<0.000000e+00> : vector<32x8xf32>
    %45 = tpu.matmul %11, %44, %cst_19 {dimension_numbers = #tpu.dot_dimension_numbers<[1], [1], [0], [0], [0, 0, 1, 0], [], []>} : vector<32x32xf32>, vector<8x32xf32>, vector<32x8xf32> -> vector<32x8xf32>
    %cst_20 = arith.constant 2.000000e+01 : f32
    %46 = vector.broadcast %cst_20 : f32 to vector<32x8xf32>
    %47 = arith.mulf %46, %45 : vector<32x8xf32>
    %48 = vector.shape_cast %47 : vector<32x8xf32> to vector<2x16x8xf32>
    %49 = vector.extract_strided_slice %48 {offsets = [0, 0, 4], sizes = [2, 16, 4], strides = [1, 1, 1]} : vector<2x16x8xf32> to vector<2x16x4xf32>
    %cst_21 = arith.constant dense<0xFF800000> : vector<2x4xf32>
    %50 = vector.multi_reduction <maximumf>, %49, %cst_21 [1] : vector<2x16x4xf32> to vector<2x4xf32>
    %51 = vector.shape_cast %50 : vector<2x4xf32> to vector<2x1x4xf32>
    %52 = vector.broadcast %51 : vector<2x1x4xf32> to vector<2x16x4xf32>
    %53 = arith.subf %49, %52 : vector<2x16x4xf32>
    %54 = math.exp %53 : vector<2x16x4xf32>
    %cst_22 = arith.constant dense<0.000000e+00> : vector<2x4xf32>
    %55 = vector.multi_reduction <add>, %54, %cst_22 [1] : vector<2x16x4xf32> to vector<2x4xf32>
    %56 = vector.shape_cast %55 : vector<2x4xf32> to vector<2x1x4xf32>
    %57 = vector.broadcast %56 : vector<2x1x4xf32> to vector<2x16x4xf32>
    %58 = arith.divf %54, %57 : vector<2x16x4xf32>
    %59 = vector.extract_strided_slice %48 {offsets = [0, 0, 0], sizes = [2, 16, 4], strides = [1, 1, 1]} : vector<2x16x8xf32> to vector<2x16x4xf32>
    %60 = arith.mulf %59, %58 : vector<2x16x4xf32>
    %cst_23 = arith.constant dense<0.000000e+00> : vector<2x4xf32>
    %61 = vector.multi_reduction <add>, %60, %cst_23 [1] : vector<2x16x4xf32> to vector<2x4xf32>
    %cst_24 = arith.constant 5.000000e+00 : f32
    %62 = vector.broadcast %cst_24 : f32 to vector<2x4xf32>
    %63 = arith.mulf %62, %61 : vector<2x4xf32>
    %64 = arith.mulf %49, %58 : vector<2x16x4xf32>
    %cst_25 = arith.constant dense<0.000000e+00> : vector<2x4xf32>
    %65 = vector.multi_reduction <add>, %64, %cst_25 [1] : vector<2x16x4xf32> to vector<2x4xf32>
    %cst_26 = arith.constant 5.000000e+00 : f32
    %66 = vector.broadcast %cst_26 : f32 to vector<2x4xf32>
    %67 = arith.mulf %66, %65 : vector<2x4xf32>
    %68 = tpu.concatenate %63, %67 in 1 : vector<2x4xf32>, vector<2x4xf32> -> vector<2x8xf32>
    %c0_27 = arith.constant 0 : index
    %c0_28 = arith.constant 0 : index
    %69 = vector.load %arg6[%c0_27, %c0_28] : memref<2x8xf32, #tpu.memory_space<vmem>>, vector<2x8xf32>
    tpu.vector_store %arg6[%c0_27, %c0_28], %68 {strides = array<i32>} : memref<2x8xf32, #tpu.memory_space<vmem>>, vector<2x8xf32>,
    return
  }
  func.func @transform_0(%arg0: i32) -> (i32, i32) {
    %c0_i32 = arith.constant 0 : i32
    %c0_i32_0 = arith.constant 0 : i32
    %c0_i32_1 = arith.constant 0 : i32
    return %c0_i32, %c0_i32_0 : i32, i32
  }
  func.func @transform_1(%arg0: i32) -> (i32, i32) {
    %c0_i32 = arith.constant 0 : i32
    %c0_i32_0 = arith.constant 0 : i32
    %c0_i32_1 = arith.constant 0 : i32
    return %c0_i32, %c0_i32_0 : i32, i32
  }
  func.func @transform_2(%arg0: i32) -> (i32, i32) {
    %c0_i32 = arith.constant 0 : i32
    %c0_i32_0 = arith.constant 0 : i32
    %c0_i32_1 = arith.constant 0 : i32
    return %c0_i32, %c0_i32_0 : i32, i32
  }
  func.func @transform_3(%arg0: i32) -> (i32, i32) {
    %c0_i32 = arith.constant 0 : i32
    %c0_i32_0 = arith.constant 0 : i32
    %c0_i32_1 = arith.constant 0 : i32
    return %c0_i32, %c0_i32_0 : i32, i32
  }
  func.func @transform_4(%arg0: i32) -> (i32, i32) {
    %c0_i32 = arith.constant 0 : i32
    %c0_i32_0 = arith.constant 0 : i32
    %c0_i32_1 = arith.constant 0 : i32
    return %c0_i32, %c0_i32_0 : i32, i32
  }
  func.func @transform_5(%arg0: i32) -> (i32, i32) {
    %c0_i32 = arith.constant 0 : i32
    %c0_i32_0 = arith.constant 0 : i32
    %c0_i32_1 = arith.constant 0 : i32
    return %c0_i32, %c0_i32_0 : i32, i32
  }
}

</mosaic_0001>

<llo_original>
// kernel: dualcoop_forward.1
$region0: #{dualcoop_forward.1}
  #allocation0 [shape = 'u32[]', space=smem, size = 0x4, offset = 0x4, fixed_abs, tag = 'smem constant byte address 0x4 - core index']
  #allocation1 [shape = 'u32[72,128]{1,0:T(1,128)}', space=vmem, size = 0x9000, scoped, tag = 'internal scratch']
  %s0 = inlined_call_operand.vmem [shape: f32[32,48], index: 0, kind: input, shape index: {}]
  %s1 = inlined_call_operand.vmem [shape: f32[48,32], index: 1, kind: input, shape index: {}]
  %s2 = inlined_call_operand.vmem [shape: f32[3,32], index: 2, kind: input, shape index: {}]
  %s3 = inlined_call_operand.vmem [shape: f32[8,32], index: 3, kind: input, shape index: {}]
  %s4 = inlined_call_operand.vmem [shape: f32[32,32], index: 4, kind: input, shape index: {}]
  %s5 = inlined_call_operand.vmem [shape: f32[2,8], index: 5, kind: output, shape index: {}]
  %s6 = sld [smem:[#allocation0]]
  $region30: #{dualcoop_forward.1} parent=0
    _
  %s8 = ssub.s32 1, %s6
  %s9 = scalar_select 0, %s8, %s6
  // Predicated region
  $region2: #{dualcoop_forward.1} parent=0 // pred_check
    _
  $region3: #{dualcoop_forward.1} parent=0 // pred_check_branch
    %11 = sbr.rel (0) target = $region5
  $region4: #{dualcoop_forward.1} parent=0 // pred_region
    _
  $region5: #{dualcoop_forward.1} parent=0 // pred_fallthru
    _
  // Predicated region
  $region6: #{dualcoop_forward.1} parent=0 // pred_check
    _
  $region7: #{dualcoop_forward.1} parent=0 // pred_check_branch
    %13 = sbr.rel (0) target = $region9
  $region8: #{dualcoop_forward.1} parent=0 // pred_region
    _
  $region9: #{dualcoop_forward.1} parent=0 // pred_fallthru
    _
  // Predicated region
  $region10: #{dualcoop_forward.1} parent=0 // pred_check
    _
  $region11: #{dualcoop_forward.1} parent=0 // pred_check_branch
    %15 = sbr.rel (0) target = $region13
  $region12: #{dualcoop_forward.1} parent=0 // pred_region
    _
  $region13: #{dualcoop_forward.1} parent=0 // pred_fallthru
    _
  // Predicated region
  $region14: #{dualcoop_forward.1} parent=0 // pred_check
    _
  $region15: #{dualcoop_forward.1} parent=0 // pred_check_branch
    %17 = sbr.rel (0) target = $region17
  $region16: #{dualcoop_forward.1} parent=0 // pred_region
    _
  $region17: #{dualcoop_forward.1} parent=0 // pred_fallthru
    _
  // Predicated region
  $region18: #{dualcoop_forward.1} parent=0 // pred_check
    _
  $region19: #{dualcoop_forward.1} parent=0 // pred_check_branch
    %19 = sbr.rel (0) target = $region21
  $region20: #{dualcoop_forward.1} parent=0 // pred_region
    _
  $region21: #{dualcoop_forward.1} parent=0 // pred_fallthru
    _
  %v20 = vld [vmem:[%s0] sm:$0xff]
  %v21 = vld [vmem:[%s0 + $0x8] sm:$0xff]
  %v22 = vld [vmem:[%s0 + $0x10] sm:$0xff]
  %v23 = vld [vmem:[%s0 + $0x18] sm:$0xff]
  %v24 = vld [vmem:[%s1] sm:$0xff]
  %v25 = vld [vmem:[%s1 + $0x8] sm:$0xff]
  %v26 = vld [vmem:[%s1 + $0x10] sm:$0xff]
  %v27 = vld [vmem:[%s1 + $0x18] sm:$0xff]
  %v28 = vld [vmem:[%s1 + $0x20] sm:$0xff]
  %v29 = vld [vmem:[%s1 + $0x28] sm:$0xff]
  %v30 = vld [vmem:[%s2] sm:$0x1]
  %v31 = vperm.slane %v30, 0
  %vm32 = vcmask 392192
  %v34 = vsel %vm32, %v20, 0
  %v37 = vsel %vm32, %v21, 0
  %v40 = vsel %vm32, %v22, 0
  %v43 = vsel %vm32, %v23, 0
  %45 = vmatpush.msra.mxu0 0.0
  %46 = vmatpush.msra.mxu0 0.0
  %47 = vmatpush.msra.mxu0 0.0
  %48 = vmatpush.msra.mxu0 0.0
  %49 = vmatpush.msra.mxu0 0.0
  %50 = vmatpush.msra.mxu0 0.0
  %51 = vmatpush.msra.mxu0 0.0
  %52 = vmatpush.msra.mxu0 0.0
  %53 = vmatpush.msra.mxu0 0.0
  %54 = vmatpush.msra.mxu0 0.0
  %55 = vmatpush.msra.mxu0 %v29
  %56 = vmatpush.msra.mxu0 %v28
  %57 = vmatpush.msra.mxu0 %v27
  %58 = vmatpush.msra.mxu0 %v26
  %59 = vmatpush.msra.mxu0 %v25
  %60 = vmatpush.msra.mxu0 %v24
  %61 = vmatmul.f32.gmra.mxu0 %v34
  %v62 = vpop.f32.mrf.mxu0
  %v63 = vadd.f32 %v31, %v62
  %64 = vmatmul.f32.gmra.mxu0 %v37
  %v65 = vpop.f32.mrf.mxu0
  %v66 = vadd.f32 %v31, %v65
  %67 = vmatmul.f32.gmra.mxu0 %v40
  %v68 = vpop.f32.mrf.mxu0
  %v69 = vadd.f32 %v31, %v68
  %70 = vmatmul.f32.gmra.mxu0 %v43
  %v71 = vpop.f32.mrf.mxu0
  %v72 = vadd.f32 %v31, %v71
  %73 = vdwg.mxu0
  %v74 = vmul.f32 %v63, %v63
  %v75 = vmul.f32 %v66, %v66
  %v76 = vmul.f32 %v69, %v69
  %v77 = vmul.f32 %v72, %v72
  %vm78 = vcmask 261120
  %v79 = vsel %vm78, %v74, 0.0
  %80 = vadd.xlane.f32.xlu0 %v79
  %v81 = vpop.xlane.xlu0 %80
  %v82 = vsel %vm78, %v75, 0.0
  %83 = vadd.xlane.f32.xlu0 %v82
  %v84 = vpop.xlane.xlu0 %83
  %v85 = vsel %vm78, %v76, 0.0
  %86 = vadd.xlane.f32.xlu0 %v85
  %v87 = vpop.xlane.xlu0 %86
  %v88 = vsel %vm78, %v77, 0.0
  %89 = vadd.xlane.f32.xlu0 %v88
  %v90 = vpop.xlane.xlu0 %89
  %v91 = vrsqrt.pop %v81
  %v92 = vmul.f32 %v91, %v81
  %v93 = vmul.f32 %v92, %v91
  %v94 = vmul.f32 0.5, %v93
  %v95 = vsub.f32 1.5, %v94
  %v96 = vmul.f32 %v91, %v95
  %vm97 = vweird.f32 %v81
  %vm98 = vweird.f32 %v91
  %vm99 = vmor %vm97, %vm98
  %v100 = vsel %vm99, %v91, %v96
  %v101 = vrsqrt.pop %v84
  %v102 = vmul.f32 %v101, %v84
  %v103 = vmul.f32 %v102, %v101
  %v104 = vmul.f32 0.5, %v103
  %v105 = vsub.f32 1.5, %v104
  %v106 = vmul.f32 %v101, %v105
  %vm107 = vweird.f32 %v84
  %vm108 = vweird.f32 %v101
  %vm109 = vmor %vm107, %vm108
  %v110 = vsel %vm109, %v101, %v106
  %v111 = vrsqrt.pop %v87
  %v112 = vmul.f32 %v111, %v87
  %v113 = vmul.f32 %v112, %v111
  %v114 = vmul.f32 0.5, %v113
  %v115 = vsub.f32 1.5, %v114
  %v116 = vmul.f32 %v111, %v115
  %vm117 = vweird.f32 %v87
  %vm118 = vweird.f32 %v111
  %vm119 = vmor %vm117, %vm118
  %v120 = vsel %vm119, %v111, %v116
  %v121 = vrsqrt.pop %v90
  %v122 = vmul.f32 %v121, %v90
  %v123 = vmul.f32 %v122, %v121
  %v124 = vmul.f32 0.5, %v123
  %v125 = vsub.f32 1.5, %v124
  %v126 = vmul.f32 %v121, %v125
  %vm127 = vweird.f32 %v90
  %vm128 = vweird.f32 %v121
  %vm129 = vmor %vm127, %vm128
  %v130 = vsel %vm129, %v121, %v126
  %v131 = vmul.f32 %v63, %v100
  %v132 = vmul.f32 %v66, %v110
  %v133 = vmul.f32 %v69, %v120
  %v134 = vmul.f32 %v72, %v130
  %v135 = vld [vmem:[%s3] sm:$0xff]
  %v136 = vsel %vm78, %v135, 0.0
  %137 = vadd.xlane.f32.xlu0 %v136
  %v138 = vpop.xlane.xlu0 %137
  %v139 = vrcp.pop 32.0
  %v140 = vmul.f32 32.0, %v139
  %v141 = vsub.f32 1.0, %v140
  %v142 = vmul.f32 %v139, %v141
  %v143 = vadd.f32 %v139, %v142
  %vm144 = vweird.f32 %v139
  %v145 = vsel %vm144, %v139, %v143
  %v146 = vmul.f32 %v138, %v145
  %v147 = vsub.f32 %v135, %v146
  %v148 = vmul.f32 %v147, %v147
  %v149 = vsel %vm78, %v148, 0.0
  %150 = vadd.xlane.f32.xlu0 %v149
  %v151 = vpop.xlane.xlu0 %150
  %v152 = vmul.f32 %v151, %v145
  %v153 = vadd.f32 %v152, 1e-05
  %v154 = vrsqrt.pop %v153
  %v155 = vmul.f32 %v154, %v153
  %v156 = vmul.f32 %v155, %v154
  %v157 = vmul.f32 0.5, %v156
  %v158 = vsub.f32 1.5, %v157
  %v159 = vmul.f32 %v154, %v158
  %vm160 = vweird.f32 %v153
  %vm161 = vweird.f32 %v154
  %vm162 = vmor %vm160, %vm161
  %v163 = vsel %vm162, %v154, %v159
  %v164 = vmul.f32 %v147, %v163
  %v165 = vld [vmem:[%s2 + $0x1] sm:$0x1]
  %v166 = vperm.slane %v165, 0
  %v167 = vmul.f32 %v164, %v166
  %v168 = vld [vmem:[%s2 + $0x2] sm:$0x1]
  %v169 = vperm.slane %v168, 0
  %v170 = vadd.f32 %v167, %v169
  %v171 = vld [vmem:[%s4] sm:$0xff]
  %v172 = vld [vmem:[%s4 + $0x8] sm:$0xff]
  %v173 = vld [vmem:[%s4 + $0x10] sm:$0xff]
  %v174 = vld [vmem:[%s4 + $0x18] sm:$0xff]
  %v176 = vsel %vm78, %v170, 0
  %178 = vmatpush.msra.mxu0 0.0
  %179 = vmatpush.msra.mxu0 0.0
  %180 = vmatpush.msra.mxu0 0.0
  %181 = vmatpush.msra.mxu0 0.0
  %182 = vmatpush.msra.mxu0 0.0
  %183 = vmatpush.msra.mxu0 0.0
  %184 = vmatpush.msra.mxu0 0.0
  %185 = vmatpush.msra.mxu0 0.0
  %186 = vmatpush.msra.mxu0 0.0
  %187 = vmatpush.msra.mxu0 0.0
  %188 = vmatpush.msra.mxu0 0.0
  %189 = vmatpush.msra.mxu0 0.0
  %190 = vmatpush.msra.mxu0 %v174
  %191 = vmatpush.msra.mxu0 %v173
  %192 = vmatpush.msra.mxu0 %v172
  %193 = vmatpush.msra.mxu0 %v171
  %194 = vmatmul.f32.gmra.mxu0 %v176
  %v195 = vpop.f32.mrf.mxu0
  %v196 = vadd.f32 0.0, %v195
  %197 = vdwg.mxu0
  %v198 = vmul.f32 %v196, %v196
  %v199 = vsel %vm78, %v198, 0.0
  %200 = vadd.xlane.f32.xlu0 %v199
  %v201 = vpop.xlane.xlu0 %200
  %v202 = vrsqrt.pop %v201
  %v203 = vmul.f32 %v202, %v201
  %v204 = vmul.f32 %v203, %v202
  %v205 = vmul.f32 0.5, %v204
  %v206 = vsub.f32 1.5, %v205
  %v207 = vmul.f32 %v202, %v206
  %vm208 = vweird.f32 %v201
  %vm209 = vweird.f32 %v202
  %vm210 = vmor %vm208, %vm209
  %v211 = vsel %vm210, %v202, %v207
  %v212 = vmul.f32 %v196, %v211
  %v214 = vsel %vm78, %v131, 0
  %v217 = vsel %vm78, %v132, 0
  %v220 = vsel %vm78, %v133, 0
  %v223 = vsel %vm78, %v134, 0
  %v226 = vsel %vm78, %v212, 0
  %228 = vmatpush.xpose.msra.mxu0 0.0
  %229 = vmatpush.xpose.msra.mxu0 0.0
  %230 = vmatpush.xpose.msra.mxu0 0.0
  %231 = vmatpush.xpose.msra.mxu0 0.0
  %232 = vmatpush.xpose.msra.mxu0 0.0
  %233 = vmatpush.xpose.msra.mxu0 0.0
  %234 = vmatpush.xpose.msra.mxu0 0.0
  %235 = vmatpush.xpose.msra.mxu0 0.0
  %236 = vmatpush.xpose.msra.mxu0 0.0
  %237 = vmatpush.xpose.msra.mxu0 0.0
  %238 = vmatpush.xpose.msra.mxu0 0.0
  %239 = vmatpush.xpose.msra.mxu0 0.0
  %240 = vmatpush.xpose.msra.mxu0 0.0
  %241 = vmatpush.xpose.msra.mxu0 0.0
  %242 = vmatpush.xpose.msra.mxu0 0.0
  %243 = vmatpush.xpose.msra.mxu0 %v226
  %244 = vmatmul.f32.gmra.mxu0 %v214
  %v245 = vpop.f32.mrf.mxu0
  %v246 = vadd.f32 0.0, %v245
  %247 = vmatmul.f32.gmra.mxu0 %v217
  %v248 = vpop.f32.mrf.mxu0
  %v249 = vadd.f32 0.0, %v248
  %250 = vmatmul.f32.gmra.mxu0 %v220
  %v251 = vpop.f32.mrf.mxu0
  %v252 = vadd.f32 0.0, %v251
  %253 = vmatmul.f32.gmra.mxu0 %v223
  %v254 = vpop.f32.mrf.mxu0
  %v255 = vadd.f32 0.0, %v254
  %256 = vdwg.mxu0
  %v257 = vmul.f32 %v246, 20.0
  %v258 = vmul.f32 %v249, 20.0
  %v259 = vmul.f32 %v252, 20.0
  %v260 = vmul.f32 %v255, 20.0
  %vm261 = vcmask 64544
  %v262 = vsel %vm261, %v257, -inf
  %v263 = vsel %vm261, %v258, -inf
  %v264 = vmax.f32 %v262, %v263
  %v265 = vrot.slane %v264, 4
  %v266 = vmax.f32 %v264, %v265
  %v267 = vrot.slane %v266, 2
  %v268 = vmax.f32 %v266, %v267
  %v269 = vrot.slane %v268, 1
  %v270 = vmax.f32 %v268, %v269
  %v271 = vsel %vm261, %v259, -inf
  %v272 = vsel %vm261, %v260, -inf
  %v273 = vmax.f32 %v271, %v272
  %v274 = vrot.slane %v273, 4
  %v275 = vmax.f32 %v273, %v274
  %v276 = vrot.slane %v275, 2
  %v277 = vmax.f32 %v275, %v276
  %v278 = vrot.slane %v277, 1
  %v279 = vmax.f32 %v277, %v278
  %v280 = vsub.f32 %v257, %v270
  %v281 = vsub.f32 %v258, %v270
  %v282 = vsub.f32 %v259, %v279
  %v283 = vsub.f32 %v260, %v279
  %v284 = vmul.f32 %v280, 1.442695
  %v285 = vpow.pop %v284
  %v286 = vmul.f32 %v281, 1.442695
  %v287 = vpow.pop %v286
  %v288 = vmul.f32 %v282, 1.442695
  %v289 = vpow.pop %v288
  %v290 = vmul.f32 %v283, 1.442695
  %v291 = vpow.pop %v290
  %v292 = vsel %vm261, %v285, 0.0
  %v293 = vsel %vm261, %v287, 0.0
  %v294 = vadd.f32 %v292, %v293
  %v295 = vrot.slane %v294, 4
  %v296 = vadd.f32 %v294, %v295
  %v297 = vrot.slane %v296, 2
  %v298 = vadd.f32 %v296, %v297
  %v299 = vrot.slane %v298, 1
  %v300 = vadd.f32 %v298, %v299
  %v301 = vsel %vm261, %v289, 0.0
  %v302 = vsel %vm261, %v291, 0.0
  %v303 = vadd.f32 %v301, %v302
  %v304 = vrot.slane %v303, 4
  %v305 = vadd.f32 %v303, %v304
  %v306 = vrot.slane %v305, 2
  %v307 = vadd.f32 %v305, %v306
  %v308 = vrot.slane %v307, 1
  %v309 = vadd.f32 %v307, %v308
  %v310 = vrcp.pop %v300
  %v311 = vmul.f32 %v300, %v310
  %v312 = vsub.f32 1.0, %v311
  %v313 = vmul.f32 %v310, %v312
  %v314 = vadd.f32 %v310, %v313
  %vm315 = vweird.f32 %v300
  %vm316 = vweird.f32 %v310
  %vm317 = vmor %vm315, %vm316
  %v318 = vsel %vm317, %v310, %v314
  %v319 = vand.u32 2147483647, %v300
  %vm320 = vcmp.eq.f32.partialorder %v319, 8.507059e+37
  %v321 = vand.u32 %v300, 2147483648
  %v322 = vor.u32 1.1754944e-38, %v321
  %v323 = vsel %vm320, %v322, %v318
  %v324 = vmul.f32 %v285, %v323
  %v325 = vmul.f32 %v287, %v323
  %v326 = vrcp.pop %v309
  %v327 = vmul.f32 %v309, %v326
  %v328 = vsub.f32 1.0, %v327
  %v329 = vmul.f32 %v326, %v328
  %v330 = vadd.f32 %v326, %v329
  %vm331 = vweird.f32 %v309
  %vm332 = vweird.f32 %v326
  %vm333 = vmor %vm331, %vm332
  %v334 = vsel %vm333, %v326, %v330
  %v335 = vand.u32 2147483647, %v309
  %vm336 = vcmp.eq.f32.partialorder %v335, 8.507059e+37
  %v337 = vand.u32 %v309, 2147483648
  %v338 = vor.u32 1.1754944e-38, %v337
  %v339 = vsel %vm336, %v338, %v334
  %v340 = vmul.f32 %v289, %v339
  %v341 = vmul.f32 %v291, %v339
  %346 = vrot.lane.b32.xlu0 %v324, 124
  %v347 = vpop.permute.xlu0 %346
  %348 = vrot.lane.b32.xlu0 %v325, 124
  %v349 = vpop.permute.xlu0 %348
  %350 = vrot.lane.b32.xlu0 %v340, 124
  %v351 = vpop.permute.xlu0 %350
  %352 = vrot.lane.b32.xlu0 %v341, 124
  %v353 = vpop.permute.xlu0 %352
  %v358 = vmul.f32 %v257, %v347
  %v359 = vmul.f32 %v258, %v349
  %v360 = vmul.f32 %v259, %v351
  %v361 = vmul.f32 %v260, %v353
  %vm362 = vcmask 31744
  %v363 = vsel %vm362, %v358, 0.0
  %v364 = vsel %vm362, %v359, 0.0
  %v365 = vadd.f32 %v363, %v364
  %v366 = vrot.slane %v365, 4
  %v367 = vadd.f32 %v365, %v366
  %v368 = vrot.slane %v367, 2
  %v369 = vadd.f32 %v367, %v368
  %v370 = vrot.slane %v369, 1
  %v371 = vadd.f32 %v369, %v370
  %v372 = vsel %vm362, %v360, 0.0
  %v373 = vsel %vm362, %v361, 0.0
  %v374 = vadd.f32 %v372, %v373
  %v375 = vrot.slane %v374, 4
  %v376 = vadd.f32 %v374, %v375
  %v377 = vrot.slane %v376, 2
  %v378 = vadd.f32 %v376, %v377
  %v379 = vrot.slane %v378, 1
  %v380 = vadd.f32 %v378, %v379
  %v381 = vmul.f32 %v371, 5.0
  %v382 = vmul.f32 %v380, 5.0
  %v383 = vmul.f32 %v257, %v324
  %v384 = vmul.f32 %v258, %v325
  %v385 = vmul.f32 %v259, %v340
  %v386 = vmul.f32 %v260, %v341
  %v387 = vsel %vm261, %v383, 0.0
  %v388 = vsel %vm261, %v384, 0.0
  %v389 = vadd.f32 %v387, %v388
  %v390 = vrot.slane %v389, 4
  %v391 = vadd.f32 %v389, %v390
  %v392 = vrot.slane %v391, 2
  %v393 = vadd.f32 %v391, %v392
  %v394 = vrot.slane %v393, 1
  %v395 = vadd.f32 %v393, %v394
  %v396 = vsel %vm261, %v385, 0.0
  %v397 = vsel %vm261, %v386, 0.0
  %v398 = vadd.f32 %v396, %v397
  %v399 = vrot.slane %v398, 4
  %v400 = vadd.f32 %v398, %v399
  %v401 = vrot.slane %v400, 2
  %v402 = vadd.f32 %v400, %v401
  %v403 = vrot.slane %v402, 1
  %v404 = vadd.f32 %v402, %v403
  %v405 = vmul.f32 %v395, 5.0
  %v406 = vmul.f32 %v404, 5.0
  %vm409 = vcmask 1041409
  %v410 = vsel %vm409, %v382, %v381
  %v414 = vsel %vm409, %v406, %v405
  %v416 = vsel %vm362, %v410, %v414
  %vm417 = vcmask 58368
  %418 = vst.msk [vmem:[%s5] sm:$0x3] %vm417, %v416
  // Predicated region
  $region22: #{dualcoop_forward.1} parent=0 // pred_check
    _
  $region23: #{dualcoop_forward.1} parent=0 // pred_check_branch
    %420 = sbr.rel (0) target = $region25
  $region24: #{dualcoop_forward.1} parent=0 // pred_region
    _
  $region25: #{dualcoop_forward.1} parent=0 // pred_fallthru
    _
  // Predicated region
  $region26: #{dualcoop_forward.1} parent=0 // pred_check
    _
  $region27: #{dualcoop_forward.1} parent=0 // pred_check_branch
    %422 = sbr.rel (0) target = $region29
  $region28: #{dualcoop_forward.1} parent=0 // pred_region
    _
  $region29: #{dualcoop_forward.1} parent=0 // pred_fallthru
    _

</llo_original>
